<compile_context>
chip_gen: v5e
topology: v5e:2x2
jax: 0.10.0
libtpu: 0.0.40
codegen_flags: <defaults>
</compile_context>

<pallas_src>
import functools
import math

import jax
import jax.numpy as jnp
from jax import lax
from jax.experimental import pallas as pl
from jax.experimental.pallas import tpu as pltpu


def _rps_kernel(pts_ref, keys_ref, rep_ref, out_ref, lv_ref, sel_ref, *,
                n_points, key_bits, lane_pow2, chunk, rank_blk):
    P = n_points
    N = pts_ref.shape[2]                      # padded point count (multiple of 128)
    BIG = jnp.int32(2 ** 31 - 1)              # sentinel; real packed keys are < 2^30

    pts = pts_ref[0]                                                  # (3, N) f32
    mask = jnp.sum(pts, axis=0, keepdims=True) != 0.0                 # (1, N) bool
    n_pts = jnp.sum(mask.astype(jnp.int32))                           # scalar

    lane_iota = lax.broadcasted_iota(jnp.int32, (1, N), 1)
    row_iota = lax.broadcasted_iota(jnp.int32, (P, 1), 0)
    is_perm = n_pts >= P

    # ---------------- branch A: WITHOUT replacement (randperm[:P]) ----------------
    @pl.when(is_perm)
    def _perm():
        # P smallest random keys among nonzero points == uniform sample w/o replacement.
        # Pack key*lane_pow2 + lane into one int32 so min() fuses value+argmin in a
        # single cross-lane reduction; packed values are unique and < 2^30 < BIG.
        kb = keys_ref[0] & jnp.int32((1 << key_bits) - 1)             # (1, N)
        packed = jnp.where(mask, kb * lane_pow2 + lane_iota, BIG)     # (1, N)

        def body(i, carry):
            packed_c, sel_c = carry
            mn = jnp.min(packed_c)                       # one cross-lane reduction
            idx = mn & (lane_pow2 - 1)                   # winner's lane index
            sel_c = jnp.where(row_iota == i, idx, sel_c)
            packed_c = jnp.where(packed_c == mn, BIG, packed_c)
            return packed_c, sel_c

        _, sel = lax.fori_loop(0, P, body,
                               (packed, jnp.full((P, 1), -1, jnp.int32)))
        sel_ref[...] = sel                     # (P, 1) selected lane per output row
        lv_ref[...] = lane_iota                # per-lane match value = lane index

    # ---------------- branch B: WITH replacement (randint over ranks) -------------
    @pl.when(jnp.logical_not(is_perm))
    def _repl():
        # Rank table: inclusive count of nonzero points, built per 128-lane block with
        # a 128x128 triangular matmul + running scalar offset (no N^2 materialization).
        tri = (lax.broadcasted_iota(jnp.int32, (rank_blk, rank_blk), 0)
               <= lax.broadcasted_iota(jnp.int32, (rank_blk, rank_blk), 1)
               ).astype(jnp.float32)                                   # (blk, blk)

        def blk_body(j, offset):
            start = pl.multiple_of(j * rank_blk, rank_blk)
            p_blk = pts_ref[0, :, pl.ds(start, rank_blk)]              # (3, blk)
            m_blk = jnp.sum(p_blk, axis=0, keepdims=True) != 0.0       # (1, blk)
            cs = jnp.dot(m_blk.astype(jnp.float32), tri,
                         preferred_element_type=jnp.float32)           # (1, blk)
            rank = cs.astype(jnp.int32) + offset                       # global rank
            lv_ref[:, pl.ds(start, rank_blk)] = jnp.where(m_blk, rank, -1)
            return offset + jnp.sum(m_blk.astype(jnp.int32))

        lax.fori_loop(0, N // rank_blk, blk_body, jnp.int32(0))

        # uniform draw over ranks [1, n_pts]  (torch.randint semantics, with replacement)
        safe_n = jnp.maximum(n_pts, 1)
        u = rep_ref[0]                                                 # (P, 1) in [0,1)
        draw = jnp.floor(u * n_pts.astype(jnp.float32)).astype(jnp.int32)
        # NOTE: all-zero cloud (n_pts == 0) -> no rank ever matches -> output rows are
        # zeros (the PyTorch reference would raise on randint(0, 0, ...)).
        sel_ref[...] = jnp.minimum(draw, safe_n - 1) + 1

    # ---------------- chunked one-hot gather on the MXU ---------------------------
    sel = sel_ref[...]                                                 # (P, 1) i32

    def gather_chunk(c, acc):
        start = pl.multiple_of(c * chunk, chunk)
        p_chunk = pts_ref[0, :, pl.ds(start, chunk)]                   # (3, C)
        lv_chunk = lv_ref[:, pl.ds(start, chunk)]                      # (1, C)
        onehot = (lv_chunk == sel).astype(jnp.float32)                 # (P, C)
        return acc + lax.dot_general(p_chunk, onehot,
                                     (((1,), (1,)), ((), ())),
                                     preferred_element_type=jnp.float32)  # (3, P)

    acc = lax.fori_loop(0, N // chunk, gather_chunk,
                        jnp.zeros((3, P), jnp.float32))
    out_ref[0] = acc.astype(out_ref.dtype)


def random_point_sampling(pred_cloud, partial_cloud=None, *, n_points, seed=0):
    if partial_cloud is not None:
        pred_cloud = jnp.concatenate([partial_cloud, pred_cloud], axis=1)
    pred_cloud = pred_cloud.astype(jnp.float32)
    B, N, C = pred_cloud.shape
    assert C == 3, "point clouds must be (B, N, 3)"

    # pad point axis to a lane-friendly multiple of 128 with zero points
    # (zero points are removed by the nonzero filter, so padding is transparent)
    Npad = max(128, ((N + 127) // 128) * 128)
    pts = jnp.transpose(pred_cloud, (0, 2, 1))                 # (B, 3, N)
    pts = jnp.pad(pts, ((0, 0), (0, 0), (0, Npad - N)))        # (B, 3, Npad)

    log2_lanes = int(math.ceil(math.log2(Npad)))
    lane_pow2 = 1 << log2_lanes
    key_bits = max(1, 30 - log2_lanes)                         # keep packed keys < 2^30
    chunk = 512 if Npad % 512 == 0 else (256 if Npad % 256 == 0 else 128)
    rank_blk = 128

    # TODO(synk): torch's exact randint/randperm bit-streams cannot be matched; the
    # sampling distribution is reproduced with jax.random draws generated here and
    # consumed inside the kernel (works on TPU and in interpret mode).
    kkey, rkey = jax.random.split(jax.random.PRNGKey(seed))
    keys = jax.random.randint(kkey, (B, 1, Npad), 0, 1 << key_bits, dtype=jnp.int32)
    rep = jax.random.uniform(rkey, (B, n_points, 1), dtype=jnp.float32)

    kernel = functools.partial(_rps_kernel, n_points=n_points, key_bits=key_bits,
                               lane_pow2=lane_pow2, chunk=chunk, rank_blk=rank_blk)
    out = pl.pallas_call(
        kernel,
        out_shape=jax.ShapeDtypeStruct((B, 3, n_points), jnp.float32),
        grid=(B,),
        in_specs=[pl.BlockSpec((1, 3, Npad), lambda b: (b, 0, 0)),
                  pl.BlockSpec((1, 1, Npad), lambda b: (b, 0, 0)),
                  pl.BlockSpec((1, n_points, 1), lambda b: (b, 0, 0))],
        out_specs=pl.BlockSpec((1, 3, n_points), lambda b: (b, 0, 0)),
        scratch_shapes=[pltpu.VMEM((1, Npad), jnp.int32),        # per-lane match value
                        pltpu.VMEM((n_points, 1), jnp.int32)],   # per-row selection
        compiler_params=pltpu.CompilerParams(
            dimension_semantics=("parallel",),
            vmem_limit_bytes=32 * 1024 * 1024),
    )(pts, keys, rep)
    return jnp.transpose(out, (0, 2, 1))                        # (B, n_points, 3)


if __name__ == "__main__":
    key = jax.random.PRNGKey(0)
    k1, k2, k3 = jax.random.split(key, 3)

    B, N, Npart, P = 2, 40, 24, 16
    pred = jax.random.normal(k1, (B, N, 3), jnp.float32)
    partial = jax.random.normal(k2, (B, Npart, 3), jnp.float32)
    # zero out some points to exercise the nonzero filter
    pred = pred.at[:, ::5, :].set(0.0)

    # case 1: plenty of nonzero points -> randperm (without replacement) branch
    out1 = random_point_sampling(pred, partial, n_points=P, seed=0)
    jax.block_until_ready(out1)
    assert out1.shape == (B, P, 3)
    assert bool(jnp.all(jnp.abs(jnp.sum(out1, axis=-1)) > 0)), \
        "sampled a zero point in the no-replacement branch"

    # case 2: fewer nonzero points than n_points -> randint (with replacement) branch
    sparse = jnp.zeros((B, N, 3), jnp.float32)
    sparse = sparse.at[:, :5, :].set(jax.random.normal(k3, (B, 5, 3), jnp.float32))
    out2 = random_point_sampling(sparse, None, n_points=P, seed=1)
    jax.block_until_ready(out2)
    assert out2.shape == (B, P, 3)
    assert bool(jnp.all(jnp.abs(jnp.sum(out2, axis=-1)) > 0)), \
        "sampled a zero point in the with-replacement branch"

    print("KERNEL_OK")
</pallas_src>

<mosaic_0001>
module attributes {stable_mosaic.version = 11 : i64} {
  func.func @_rps_kernel(%arg0: i32, %arg1: memref<1x3x128xf32, #tpu.memory_space<vmem>>, %arg2: memref<1x1x128xi32, #tpu.memory_space<vmem>>, %arg3: memref<1x16x1xf32, #tpu.memory_space<vmem>>, %arg4: memref<1x3x16xf32, #tpu.memory_space<vmem>>, %arg5: memref<1x128xi32, #tpu.memory_space<vmem>>, %arg6: memref<16x1xi32, #tpu.memory_space<vmem>>) attributes {dimension_semantics = [#tpu.dimension_semantics<parallel>], iteration_bounds = array<i64: 2>, scalar_prefetch = 0 : i64, scratch_operands = 2 : i64, tpu.core_type = #tpu.core_type<tc>, window_params = [{transform_indices = @transform_0, window_bounds = array<i64: 1, 3, 128>}, {transform_indices = @transform_1, window_bounds = array<i64: 1, 1, 128>}, {transform_indices = @transform_2, window_bounds = array<i64: 1, 16, 1>}, {transform_indices = @transform_3, window_bounds = array<i64: 1, 3, 16>}]} {
    %c0 = arith.constant 0 : index
    %c0_0 = arith.constant 0 : index
    %c0_1 = arith.constant 0 : index
    %0 = vector.load %arg1[%c0, %c0_0, %c0_1] : memref<1x3x128xf32, #tpu.memory_space<vmem>>, vector<1x3x128xf32>
    %1 = vector.shape_cast %0 : vector<1x3x128xf32> to vector<3x128xf32>
    %cst = arith.constant dense<0.000000e+00> : vector<128xf32>
    %2 = vector.multi_reduction <add>, %1, %cst [0] : vector<3x128xf32> to vector<128xf32>
    %3 = vector.shape_cast %2 : vector<128xf32> to vector<1x128xf32>
    %cst_2 = arith.constant 0.000000e+00 : f32
    %4 = vector.broadcast %cst_2 : f32 to vector<1x128xf32>
    %5 = arith.cmpf one, %3, %4 : vector<1x128xf32>
    %6 = arith.extui %5 : vector<1x128xi1> to vector<1x128xi32>
    %7 = vector.shape_cast %6 : vector<1x128xi32> to vector<1x1x128xi32>
    %cst_3 = arith.constant dense<0> : vector<1xi32>
    %8 = vector.multi_reduction <add>, %7, %cst_3 [1, 2] : vector<1x1x128xi32> to vector<1xi32>
    %9 = vector.shape_cast %8 : vector<1xi32> to vector<1x1x1xi32>
    %10 = vector.extract %9[0, 0, 0] : i32 from vector<1x1x1xi32>
    %11 = tpu.iota {dimensions = array<i32: 1>} : vector<1x128xi32>
    %12 = tpu.iota {dimensions = array<i32: 0>} : vector<16x1xi32>
    %c16_i32 = arith.constant 16 : i32
    %13 = arith.cmpi sge, %10, %c16_i32 : i32
    %14 = arith.extui %13 : i1 to i32
    %c2147483647_i32 = arith.constant 2147483647 : i32
    %c0_i32 = arith.constant 0 : i32
    %15 = arith.cmpi ne, %14, %c0_i32 : i32
    scf.if %15 {
      %c0_16 = arith.constant 0 : index
      %c0_17 = arith.constant 0 : index
      %c0_18 = arith.constant 0 : index
      %38 = vector.load %arg2[%c0_16, %c0_17, %c0_18] : memref<1x1x128xi32, #tpu.memory_space<vmem>>, vector<1x1x128xi32>
      %39 = vector.shape_cast %38 : vector<1x1x128xi32> to vector<1x128xi32>
      %c8388607_i32 = arith.constant 8388607 : i32
      %40 = vector.broadcast %c8388607_i32 : i32 to vector<1x128xi32>
      %41 = arith.andi %39, %40 : vector<1x128xi32>
      %c128_i32_19 = arith.constant 128 : i32
      %42 = vector.broadcast %c128_i32_19 : i32 to vector<1x128xi32>
      %43 = arith.muli %41, %42 : vector<1x128xi32>
      %44 = arith.addi %43, %11 : vector<1x128xi32>
      %45 = vector.broadcast %c2147483647_i32 : i32 to vector<1x128xi32>
      %46 = arith.select %5, %44, %45 : vector<1x128xi1>, vector<1x128xi32>
      %c-1_i32 = arith.constant -1 : i32
      %47 = vector.broadcast %c-1_i32 : i32 to vector<16x1xi32>
      %c0_i32_20 = arith.constant 0 : i32
      %c16_i32_21 = arith.constant 16 : i32
      %48 = arith.addi %c0_i32_20, %c16_i32_21 : i32
      %c1_i32_22 = arith.constant 1 : i32
      %49:2 = scf.for %arg7 = %c0_i32_20 to %48 step %c1_i32_22 iter_args(%arg8 = %46, %arg9 = %47) -> (vector<1x128xi32>, vector<16x1xi32>)  : i32 {
        %52 = vector.shape_cast %arg8 : vector<1x128xi32> to vector<1x1x128xi32>
        %cst_28 = arith.constant dense<2147483647> : vector<1xi32>
        %53 = vector.multi_reduction <minsi>, %52, %cst_28 [1, 2] : vector<1x1x128xi32> to vector<1xi32>
        %54 = vector.shape_cast %53 : vector<1xi32> to vector<1x1x1xi32>
        %55 = vector.extract %54[0, 0, 0] : i32 from vector<1x1x1xi32>
        %c127_i32 = arith.constant 127 : i32
        %56 = arith.andi %55, %c127_i32 : i32
        %57 = vector.broadcast %arg7 : i32 to vector<16x1xi32>
        %58 = arith.cmpi eq, %12, %57 : vector<16x1xi32>
        %59 = vector.broadcast %56 : i32 to vector<16x1xi32>
        %60 = arith.select %58, %59, %arg9 : vector<16x1xi1>, vector<16x1xi32>
        %61 = vector.broadcast %55 : i32 to vector<1x128xi32>
        %62 = arith.cmpi eq, %arg8, %61 : vector<1x128xi32>
        %63 = vector.broadcast %c2147483647_i32 : i32 to vector<1x128xi32>
        %64 = arith.select %62, %63, %arg8 : vector<1x128xi1>, vector<1x128xi32>
        scf.yield %64, %60 : vector<1x128xi32>, vector<16x1xi32>
      }
      %c16_i32_23 = arith.constant 16 : i32
      %c0_24 = arith.constant 0 : index
      %c0_25 = arith.constant 0 : index
      %50 = vector.load %arg6[%c0_24, %c0_25] : memref<16x1xi32, #tpu.memory_space<vmem>>, vector<16x1xi32>
      tpu.vector_store %arg6[%c0_24, %c0_25], %49#1 {strides = array<i32>} : memref<16x1xi32, #tpu.memory_space<vmem>>, vector<16x1xi32>,
      %c0_26 = arith.constant 0 : index
      %c0_27 = arith.constant 0 : index
      %51 = vector.load %arg5[%c0_26, %c0_27] : memref<1x128xi32, #tpu.memory_space<vmem>>, vector<1x128xi32>
      tpu.vector_store %arg5[%c0_26, %c0_27], %11 {strides = array<i32>} : memref<1x128xi32, #tpu.memory_space<vmem>>, vector<1x128xi32>,
    } else {
    }
    %true = arith.constant true
    %16 = arith.xori %13, %true : i1
    %17 = arith.extui %16 : i1 to i32
    %c0_i32_4 = arith.constant 0 : i32
    %18 = arith.cmpi ne, %17, %c0_i32_4 : i32
    scf.if %18 {
      %38 = tpu.iota {dimensions = array<i32: 0>} : vector<128x128xi32>
      %39 = tpu.iota {dimensions = array<i32: 1>} : vector<128x128xi32>
      %40 = arith.cmpi sle, %38, %39 : vector<128x128xi32>
      %41 = arith.extui %40 : vector<128x128xi1> to vector<128x128xi32>
      %42 = arith.sitofp %41 : vector<128x128xi32> to vector<128x128xf32>
      %c0_i32_16 = arith.constant 0 : i32
      %c0_i32_17 = arith.constant 0 : i32
      %c128_i32_18 = arith.constant 128 : i32
      %43 = arith.muli %c0_i32_17, %c128_i32_18 : i32
      %44 = tpu.assume_multiple %43, 128 : i32
      %c0_19 = arith.constant 0 : index
      %c0_20 = arith.constant 0 : index
      %45 = arith.index_cast %44 : i32 to index
      %46 = vector.load %arg1[%c0_19, %c0_20, %45] : memref<1x3x128xf32, #tpu.memory_space<vmem>>, vector<1x3x128xf32>
      %47 = vector.shape_cast %46 : vector<1x3x128xf32> to vector<3x128xf32>
      %cst_21 = arith.constant dense<0.000000e+00> : vector<128xf32>
      %48 = vector.multi_reduction <add>, %47, %cst_21 [0] : vector<3x128xf32> to vector<128xf32>
      %49 = vector.shape_cast %48 : vector<128xf32> to vector<1x128xf32>
      %cst_22 = arith.constant 0.000000e+00 : f32
      %50 = vector.broadcast %cst_22 : f32 to vector<1x128xf32>
      %51 = arith.cmpf one, %49, %50 : vector<1x128xf32>
      %52 = arith.extui %51 : vector<1x128xi1> to vector<1x128xi32>
      %53 = arith.sitofp %52 : vector<1x128xi32> to vector<1x128xf32>
      %cst_23 = arith.constant dense<0.000000e+00> : vector<1x128xf32>
      %54 = tpu.matmul %53, %42, %cst_23 {dimension_numbers = #tpu.dot_dimension_numbers<[1], [0], [0], [1], [0, 0, 1, 1], [], []>} : vector<1x128xf32>, vector<128x128xf32>, vector<1x128xf32> -> vector<1x128xf32>
      %55 = arith.fptosi %54 : vector<1x128xf32> to vector<1x128xi32>
      %56 = vector.broadcast %c0_i32_16 : i32 to vector<1x128xi32>
      %57 = arith.addi %55, %56 : vector<1x128xi32>
      %c-1_i32 = arith.constant -1 : i32
      %58 = vector.broadcast %c-1_i32 : i32 to vector<1x128xi32>
      %59 = arith.select %51, %57, %58 : vector<1x128xi1>, vector<1x128xi32>
      %c0_24 = arith.constant 0 : index
      %60 = arith.index_cast %44 : i32 to index
      %61 = vector.load %arg5[%c0_24, %60] : memref<1x128xi32, #tpu.memory_space<vmem>>, vector<1x128xi32>
      tpu.vector_store %arg5[%c0_24, %60], %59 {strides = array<i32>} : memref<1x128xi32, #tpu.memory_space<vmem>>, vector<1x128xi32>,
      %62 = arith.extui %51 : vector<1x128xi1> to vector<1x128xi32>
      %63 = vector.shape_cast %62 : vector<1x128xi32> to vector<1x1x128xi32>
      %cst_25 = arith.constant dense<0> : vector<1xi32>
      %64 = vector.multi_reduction <add>, %63, %cst_25 [1, 2] : vector<1x1x128xi32> to vector<1xi32>
      %65 = vector.shape_cast %64 : vector<1xi32> to vector<1x1x1xi32>
      %66 = vector.extract %65[0, 0, 0] : i32 from vector<1x1x1xi32>
      %67 = arith.addi %c0_i32_16, %66 : i32
      %c1_i32_26 = arith.constant 1 : i32
      %c1_i32_27 = arith.constant 1 : i32
      %68 = arith.maxsi %10, %c1_i32_27 : i32
      %c0_28 = arith.constant 0 : index
      %c0_29 = arith.constant 0 : index
      %c0_30 = arith.constant 0 : index
      %69 = vector.load %arg3[%c0_28, %c0_29, %c0_30] : memref<1x16x1xf32, #tpu.memory_space<vmem>>, vector<1x16x1xf32>
      %70 = vector.shape_cast %69 : vector<1x16x1xf32> to vector<16x1xf32>
      %71 = arith.sitofp %10 : i32 to f32
      %72 = vector.broadcast %71 : f32 to vector<16x1xf32>
      %73 = arith.mulf %70, %72 : vector<16x1xf32>
      %74 = math.floor %73 : vector<16x1xf32>
      %75 = arith.fptosi %74 : vector<16x1xf32> to vector<16x1xi32>
      %c1_i32_31 = arith.constant 1 : i32
      %76 = arith.subi %68, %c1_i32_31 : i32
      %77 = vector.broadcast %76 : i32 to vector<16x1xi32>
      %78 = arith.minsi %75, %77 : vector<16x1xi32>
      %c1_i32_32 = arith.constant 1 : i32
      %79 = vector.broadcast %c1_i32_32 : i32 to vector<16x1xi32>
      %80 = arith.addi %78, %79 : vector<16x1xi32>
      %c0_33 = arith.constant 0 : index
      %c0_34 = arith.constant 0 : index
      %81 = vector.load %arg6[%c0_33, %c0_34] : memref<16x1xi32, #tpu.memory_space<vmem>>, vector<16x1xi32>
      tpu.vector_store %arg6[%c0_33, %c0_34], %80 {strides = array<i32>} : memref<16x1xi32, #tpu.memory_space<vmem>>, vector<16x1xi32>,
    } else {
    }
    %c0_5 = arith.constant 0 : index
    %c0_6 = arith.constant 0 : index
    %19 = vector.load %arg6[%c0_5, %c0_6] : memref<16x1xi32, #tpu.memory_space<vmem>>, vector<16x1xi32>
    %cst_7 = arith.constant 0.000000e+00 : f32
    %20 = vector.broadcast %cst_7 : f32 to vector<3x16xf32>
    %c0_i32_8 = arith.constant 0 : i32
    %c128_i32 = arith.constant 128 : i32
    %21 = arith.muli %c0_i32_8, %c128_i32 : i32
    %22 = tpu.assume_multiple %21, 128 : i32
    %c0_9 = arith.constant 0 : index
    %c0_10 = arith.constant 0 : index
    %23 = arith.index_cast %22 : i32 to index
    %24 = vector.load %arg1[%c0_9, %c0_10, %23] : memref<1x3x128xf32, #tpu.memory_space<vmem>>, vector<1x3x128xf32>
    %25 = vector.shape_cast %24 : vector<1x3x128xf32> to vector<3x128xf32>
    %c0_11 = arith.constant 0 : index
    %26 = arith.index_cast %22 : i32 to index
    %27 = vector.load %arg5[%c0_11, %26] : memref<1x128xi32, #tpu.memory_space<vmem>>, vector<1x128xi32>
    %28 = vector.broadcast %27 : vector<1x128xi32> to vector<16x128xi32>
    %29 = vector.broadcast %19 : vector<16x1xi32> to vector<16x128xi32>
    %30 = arith.cmpi eq, %28, %29 : vector<16x128xi32>
    %31 = arith.extui %30 : vector<16x128xi1> to vector<16x128xi32>
    %32 = arith.sitofp %31 : vector<16x128xi32> to vector<16x128xf32>
    %cst_12 = arith.constant dense<0.000000e+00> : vector<3x16xf32>
    %33 = tpu.matmul %25, %32, %cst_12 {dimension_numbers = #tpu.dot_dimension_numbers<[1], [1], [0], [0], [0, 0, 1, 0], [], []>} : vector<3x128xf32>, vector<16x128xf32>, vector<3x16xf32> -> vector<3x16xf32>
    %34 = arith.addf %20, %33 : vector<3x16xf32>
    %c1_i32 = arith.constant 1 : i32
    %c0_13 = arith.constant 0 : index
    %c0_14 = arith.constant 0 : index
    %c0_15 = arith.constant 0 : index
    %35 = vector.load %arg4[%c0_13, %c0_14, %c0_15] : memref<1x3x16xf32, #tpu.memory_space<vmem>>, vector<1x3x16xf32>
    %36 = vector.shape_cast %35 : vector<1x3x16xf32> to vector<3x16xf32>
    %37 = vector.shape_cast %34 : vector<3x16xf32> to vector<1x3x16xf32>
    tpu.vector_store %arg4[%c0_13, %c0_14, %c0_15], %37 {strides = array<i32>} : memref<1x3x16xf32, #tpu.memory_space<vmem>>, vector<1x3x16xf32>,
    return
  }
  func.func @transform_0(%arg0: i32) -> (i32, i32, i32) {
    %c0_i32 = arith.constant 0 : i32
    %c0_i32_0 = arith.constant 0 : i32
    %c0_i32_1 = arith.constant 0 : i32
    return %arg0, %c0_i32, %c0_i32_0 : i32, i32, i32
  }
  func.func @transform_1(%arg0: i32) -> (i32, i32, i32) {
    %c0_i32 = arith.constant 0 : i32
    %c0_i32_0 = arith.constant 0 : i32
    %c0_i32_1 = arith.constant 0 : i32
    return %arg0, %c0_i32, %c0_i32_0 : i32, i32, i32
  }
  func.func @transform_2(%arg0: i32) -> (i32, i32, i32) {
    %c0_i32 = arith.constant 0 : i32
    %c0_i32_0 = arith.constant 0 : i32
    %c0_i32_1 = arith.constant 0 : i32
    return %arg0, %c0_i32, %c0_i32_0 : i32, i32, i32
  }
  func.func @transform_3(%arg0: i32) -> (i32, i32, i32) {
    %c0_i32 = arith.constant 0 : i32
    %c0_i32_0 = arith.constant 0 : i32
    %c0_i32_1 = arith.constant 0 : i32
    return %arg0, %c0_i32, %c0_i32_0 : i32, i32, i32
  }
}

</mosaic_0001>

<llo_original>
// kernel: tpu_custom_call.1
$region0: #{tpu_custom_call.1}
  #allocation0 [shape = 'u32[]', space=smem, size = 0x4, offset = 0x4, fixed_abs, tag = 'smem constant byte address 0x4 - core index']
  #allocation1 [shape = 'u32[72,128]{1,0:T(1,128)}', space=vmem, size = 0x9000, scoped, tag = 'internal scratch']
  #allocation2 [shape = 's32[1,128]{1,0:T(1,128)}', space=vmem, size = 0x200, scoped, tag = 'scratch operand']
  #allocation3 [shape = 's32[16,1]{1,0:T(8,128)}', space=vmem, size = 0x2000, scoped, tag = 'scratch operand']
  %s0 = inlined_call_operand.vmem [shape: f32[2,3,128], index: 0, kind: input, shape index: {}]
  %s1 = inlined_call_operand.vmem [shape: s32[2,1,128], index: 1, kind: input, shape index: {}]
  %s2 = inlined_call_operand.vmem [shape: f32[2,16,1], index: 2, kind: input, shape index: {}]
  %s3 = inlined_call_operand.vmem [shape: f32[2,3,16], index: 3, kind: output, shape index: {}]
  %s4 = sld [smem:[#allocation0]]
  $region60: #{tpu_custom_call.1} parent=0
    _
  %s6 = ssub.s32 1, %s4
  %s7 = scalar_select 0, %s6, %s4
  loop: start=0, step=1, limit=4
  $region2: #{tpu_custom_call.1} parent=0 // loop_pre_header
    _
  $region3: #{tpu_custom_call.1} parent=0 // loop_header
    %s9 = sphi 0, %s13
    %p10 = scmp.ge.s32.totalorder %s9, 4
    %s19 = sphi 0, %s21
    %s22 = sphi 0, %s19
    %s23 = sphi 0, %s22
    %s39 = sphi 0, %s23
    %s45 = sphi 0, %s47
    %s48 = sphi 0, %s45
    %s49 = sphi 0, %s48
    %s65 = sphi 0, %s49
    %s71 = sphi 0, %s73
    %s74 = sphi 0, %s71
    %s75 = sphi 0, %s74
    %s91 = sphi 0, %s75
    %s97 = sphi 0, %s99
    %s100 = sphi 0, %s97
    %s101 = sphi 0, %s100
    %s117 = sphi 0, %s101
  $region4: #{tpu_custom_call.1} parent=0 // loop_header_branch
    %12 = sbr.rel (%p10) target = $region8
  $region5: #{tpu_custom_call.1} parent=0 // loop_body
    %s14 = ssub.s32 %s9, 1
    %s15 = ssub.s32 %s9, 2
    %s16 = sadd.s32 %s9, 1
    %s17 = ssub.s32 %s9, %s16
    %p18 = scmp.eq.s32.totalorder %s17, 0
    %s20 = sadd.s32 %s19, 1
    %s21 = scalar_select %p18, %s19, %s20
    %p24 = pneg %p18
    %p25 = scmp.eq.s32.totalorder %s9, 1
    %p26 = por %p24, %p25
    %p27 = scmp.ne.s32.totalorder %s19, %s22
    %p28 = scmp.eq.s32.totalorder %s9, 0
    %p29 = por %p27, %p28
    %p30 = scmp.ne.s32.totalorder %s19, %s22
    %p31 = scmp.eq.s32.totalorder %s14, 1
    %p32 = por %p30, %p31
    %p33 = scmp.ne.s32.totalorder %s22, %s23
    %p34 = scmp.eq.s32.totalorder %s14, 0
    %p35 = por %p33, %p34
    %p36 = scmp.ne.s32.totalorder %s22, %s23
    %p37 = scmp.eq.s32.totalorder %s15, 1
    %p38 = por %p36, %p37
    %p40 = scmp.ne.s32.totalorder %s23, %s39
    %p41 = scmp.eq.s32.totalorder %s15, 0
    %p42 = por %p40, %p41
    %s43 = ssub.s32 %s9, %s16
    %p44 = scmp.eq.s32.totalorder %s43, 0
    %s46 = sadd.s32 %s45, 1
    %s47 = scalar_select %p44, %s45, %s46
    %p50 = pneg %p44
    %p51 = scmp.eq.s32.totalorder %s9, 1
    %p52 = por %p50, %p51
    %p53 = scmp.ne.s32.totalorder %s45, %s48
    %p54 = scmp.eq.s32.totalorder %s9, 0
    %p55 = por %p53, %p54
    %p56 = scmp.ne.s32.totalorder %s45, %s48
    %p57 = scmp.eq.s32.totalorder %s14, 1
    %p58 = por %p56, %p57
    %p59 = scmp.ne.s32.totalorder %s48, %s49
    %p60 = scmp.eq.s32.totalorder %s14, 0
    %p61 = por %p59, %p60
    %p62 = scmp.ne.s32.totalorder %s48, %s49
    %p63 = scmp.eq.s32.totalorder %s15, 1
    %p64 = por %p62, %p63
    %p66 = scmp.ne.s32.totalorder %s49, %s65
    %p67 = scmp.eq.s32.totalorder %s15, 0
    %p68 = por %p66, %p67
    %s69 = ssub.s32 %s9, %s16
    %p70 = scmp.eq.s32.totalorder %s69, 0
    %s72 = sadd.s32 %s71, 1
    %s73 = scalar_select %p70, %s71, %s72
    %p76 = pneg %p70
    %p77 = scmp.eq.s32.totalorder %s9, 1
    %p78 = por %p76, %p77
    %p79 = scmp.ne.s32.totalorder %s71, %s74
    %p80 = scmp.eq.s32.totalorder %s9, 0
    %p81 = por %p79, %p80
    %p82 = scmp.ne.s32.totalorder %s71, %s74
    %p83 = scmp.eq.s32.totalorder %s14, 1
    %p84 = por %p82, %p83
    %p85 = scmp.ne.s32.totalorder %s74, %s75
    %p86 = scmp.eq.s32.totalorder %s14, 0
    %p87 = por %p85, %p86
    %p88 = scmp.ne.s32.totalorder %s74, %s75
    %p89 = scmp.eq.s32.totalorder %s15, 1
    %p90 = por %p88, %p89
    %p92 = scmp.ne.s32.totalorder %s75, %s91
    %p93 = scmp.eq.s32.totalorder %s15, 0
    %p94 = por %p92, %p93
    %s95 = ssub.s32 %s9, %s16
    %p96 = scmp.eq.s32.totalorder %s95, 0
    %s98 = sadd.s32 %s97, 1
    %s99 = scalar_select %p96, %s97, %s98
    %p102 = pneg %p96
    %p103 = scmp.eq.s32.totalorder %s9, 1
    %p104 = por %p102, %p103
    %p105 = scmp.ne.s32.totalorder %s97, %s100
    %p106 = scmp.eq.s32.totalorder %s9, 0
    %p107 = por %p105, %p106
    %p108 = scmp.ne.s32.totalorder %s97, %s100
    %p109 = scmp.eq.s32.totalorder %s14, 1
    %p110 = por %p108, %p109
    %p111 = scmp.ne.s32.totalorder %s100, %s101
    %p112 = scmp.eq.s32.totalorder %s14, 0
    %p113 = por %p111, %p112
    %p114 = scmp.ne.s32.totalorder %s100, %s101
    %p115 = scmp.eq.s32.totalorder %s15, 1
    %p116 = por %p114, %p115
    %p118 = scmp.ne.s32.totalorder %s101, %s117
    %p119 = scmp.eq.s32.totalorder %s15, 0
    %p120 = por %p118, %p119
    %p121 = scmp.le.s32.totalorder 1, %s9
    %p122 = scmp.lt.s32.totalorder %s9, 3
    %p123 = pnand %p121, %p122
    %p124 = pneg %p123
    // Predicated region
    $region9: #{tpu_custom_call.1} parent=5 // pred_check
      _
    $region10: #{tpu_custom_call.1} parent=5 // pred_check_branch
      %126 = sbr.rel (%p123) target = $region12
    $region11: #{tpu_custom_call.1} parent=5 // pred_region
      %s127 = ssub.s32 %s9, 1
    $region12: #{tpu_custom_call.1} parent=5 // pred_fallthru
      _
    %p128 = scmp.lt.s32.totalorder %s9, 2
    // Predicated region
    $region13: #{tpu_custom_call.1} parent=5 // pred_check
      %p129 = pneg %p128
    $region14: #{tpu_custom_call.1} parent=5 // pred_check_branch
      %131 = sbr.rel (%p129) target = $region16
    $region15: #{tpu_custom_call.1} parent=5 // pred_region
      // Predicated region
      $region17: #{tpu_custom_call.1} parent=15 // pred_check
        %p132 = pneg %p29
      $region18: #{tpu_custom_call.1} parent=15 // pred_check_branch
        %134 = sbr.rel (%p132) target = $region20
      $region19: #{tpu_custom_call.1} parent=15 // pred_region
        %p135 = scmp.lt.s32.totalorder %s9, 1
        %s136 = scalar_select %p135, %s9, 1
        %s137 = smul.addr %s136, 4
        %s138 = scalar_lea.vmem %s0, %s137
      $region20: #{tpu_custom_call.1} parent=15 // pred_fallthru
        _
      // Predicated region
      $region21: #{tpu_custom_call.1} parent=15 // pred_check
        %p139 = pneg %p55
      $region22: #{tpu_custom_call.1} parent=15 // pred_check_branch
        %141 = sbr.rel (%p139) target = $region24
      $region23: #{tpu_custom_call.1} parent=15 // pred_region
        %p142 = scmp.lt.s32.totalorder %s9, 1
        %s143 = scalar_select %p142, %s9, 1
        %s144 = scalar_lea.vmem %s1, %s143
      $region24: #{tpu_custom_call.1} parent=15 // pred_fallthru
        _
      // Predicated region
      $region25: #{tpu_custom_call.1} parent=15 // pred_check
        %p145 = pneg %p81
      $region26: #{tpu_custom_call.1} parent=15 // pred_check_branch
        %147 = sbr.rel (%p145) target = $region28
      $region27: #{tpu_custom_call.1} parent=15 // pred_region
        %p148 = scmp.lt.s32.totalorder %s9, 1
        %s149 = scalar_select %p148, %s9, 1
        %s150 = smul.addr %s149, 2
        %s151 = smul.addr %s150, 8
        %s152 = scalar_lea.vmem %s2, %s151
      $region28: #{tpu_custom_call.1} parent=15 // pred_fallthru
        _
    $region16: #{tpu_custom_call.1} parent=5 // pred_fallthru
      _
    %p153 = scmp.le.s32.totalorder 1, %s9
    %p154 = scmp.lt.s32.totalorder %s9, 3
    %p155 = pnand %p153, %p154
    %p156 = pneg %p155
    // Predicated region
    $region29: #{tpu_custom_call.1} parent=5 // pred_check
      _
    $region30: #{tpu_custom_call.1} parent=5 // pred_check_branch
      %158 = sbr.rel (%p155) target = $region32
    $region31: #{tpu_custom_call.1} parent=5 // pred_region
      %s159 = ssub.s32 %s9, 1
      %p160 = scmp.lt.s32.totalorder %s14, 1
      %s161 = scalar_select %p160, %s14, 1
      %s162 = smul.addr %s161, 4
      %s163 = scalar_lea.vmem %s0, %s162
      %p164 = pneg %p35
      %p165 = pneg %p32
      %p166 = scmp.lt.s32.totalorder %s14, 1
      %s167 = scalar_select %p166, %s14, 1
      %s168 = scalar_lea.vmem %s1, %s167
      %p169 = pneg %p61
      %p170 = pneg %p58
      %p171 = scmp.lt.s32.totalorder %s14, 1
      %s172 = scalar_select %p171, %s14, 1
      %s173 = smul.addr %s172, 2
      %s174 = smul.addr %s173, 8
      %s175 = scalar_lea.vmem %s2, %s174
      %p176 = pneg %p87
      %p177 = pneg %p84
      %p178 = pneg %p113
      %p179 = pneg %p110
      %p180 = scmp.lt.s32.totalorder %s14, 1
      %s181 = scalar_select %p180, %s14, 1
      %s182 = smul.addr %s181, 4
      %s183 = scalar_lea.vmem %s3, %s182
      %p184 = scmp.lt.s32.totalorder %s14, 1
      %s185 = scalar_select %p184, %s14, 1
      %s186 = smul.addr %s185, 4
      %s187 = scalar_lea.vmem %s0, %s186
      %p188 = scmp.lt.s32.totalorder %s14, 1
      %s189 = scalar_select %p188, %s14, 1
      %s190 = scalar_lea.vmem %s1, %s189
      %p191 = scmp.lt.s32.totalorder %s14, 1
      %s192 = scalar_select %p191, %s14, 1
      %s193 = smul.addr %s192, 2
      %s194 = smul.addr %s193, 8
      %s195 = scalar_lea.vmem %s2, %s194
      %p196 = scmp.lt.s32.totalorder %s14, 1
      %s197 = scalar_select %p196, %s14, 1
      %s198 = smul.addr %s197, 4
      %s199 = scalar_lea.vmem %s3, %s198
      %v200 = vld [vmem:[%s187] sm:$0x7]
      %vm201 = vcmask 1042432
      %v202 = vsel %vm201, %v200, 0.0
      %v203 = vrot.slane %v202, 4
      %v204 = vadd.f32 %v202, %v203
      %v205 = vrot.slane %v204, 2
      %v206 = vadd.f32 %v204, %v205
      %v207 = vrot.slane %v206, 1
      %v208 = vadd.f32 %v206, %v207
      %vm209 = vcmp.ne.f32.partialorder %v208, 0.0
      %v210 = vsel %vm209, 1, 0
      %v211 = vand.u32 %v210, 65535
      %v212 = vshrl.u32 %v210, 16
      %v213 = vcvt.s32.f32 %v211
      %v214 = vcvt.s32.f32 %v212
      %215 = vadd.xlane.f32.xlu0 %v213
      %v216 = vpop.xlane.xlu0 %215
      %217 = vadd.xlane.f32.xlu0 %v214
      %v218 = vpop.xlane.xlu0 %217
      %v219 = vcvt.f32.s32 %v216
      %v220 = vcvt.f32.s32 %v218
      %v221 = vshll.u32 %v220, 16
      %v222 = vadd.s32 %v221, %v219
      %s223 = vtos %v222
      %v224 = vlaneseq
      %v225 = vand.u32 %v224, 127
      %v226 = vlaneseq
      %v227 = vshrl.u32 %v226, 7
      %v228 = vadd.s32 %v227, 8
      %p229 = scmp.ge.s32.totalorder %s223, 16
      // Predicated region
      $region33: #{tpu_custom_call.1} parent=31 // pred_check
        %p230 = pneg %p229
      $region34: #{tpu_custom_call.1} parent=31 // pred_check_branch
        %232 = sbr.rel (%p230) target = $region36
      $region35: #{tpu_custom_call.1} parent=31 // pred_region
        %v233 = vld [vmem:[%s190] sm:$0x1]
        %v234 = vand.u32 %v233, 8388607
        %v235 = vmul.u32 %v234, 128
        %v236 = vadd.s32 %v235, %v225
        %v237 = vsel %vm209, %v236, 2147483647
        loop: start=0, step=1, limit=16
        $region37: #{tpu_custom_call.1} parent=35 // loop_pre_header
          _
        $region38: #{tpu_custom_call.1} parent=35 // loop_header
          %s239 = sphi 0, %s243
          %p240 = scmp.ge.s32.totalorder %s239, 16
          %v244 = vphi %v237, %v282
          %v245 = vphi 4294967295, %v278
          %v246 = vphi 4294967295, %v279
        $region39: #{tpu_custom_call.1} parent=35 // loop_header_branch
          %242 = sbr.rel (%p240) target = $region43
        $region40: #{tpu_custom_call.1} parent=35 // loop_body
          %vm247 = vcmask 1040384
          %v248 = vsel %vm247, %v244, 2147483647
          %v249 = vand.u32 %v248, 65535
          %v250 = vshra.s32 %v248, 16
          %v251 = vcvt.s32.f32 %v249
          %v252 = vcvt.s32.f32 %v250
          %253 = vmin.xlane.f32.xlu0 %v252
          %v254 = vpop.xlane.xlu0 %253
          %vm255 = vcmp.eq.f32.partialorder %v252, %v254
          %v256 = vsel %vm255, %v251, inf
          %257 = vmin.xlane.f32.xlu0 %v256
          %v258 = vpop.xlane.xlu0 %257
          %v259 = vcvt.f32.s32 %v258
          %v260 = vcvt.f32.s32 %v254
          %v261 = vshll.u32 %v260, 16
          %v262 = vadd.s32 %v261, %v259
          %v263 = vrot.slane %v262, 4
          %vm264 = vcmp.lt.s32.totalorder %v262, %v263
          %v265 = vsel %vm264, %v262, %v263
          %v266 = vrot.slane %v265, 2
          %vm267 = vcmp.lt.s32.totalorder %v265, %v266
          %v268 = vsel %vm267, %v265, %v266
          %v269 = vrot.slane %v268, 1
          %vm270 = vcmp.lt.s32.totalorder %v268, %v269
          %v271 = vsel %vm270, %v268, %v269
          %s272 = vtos %v271
          %s273 = sand.u32 %s272, 127
          %v274 = vstv %s239
          %vm275 = vcmp.eq.s32.totalorder %v227, %v274
          %vm276 = vcmp.eq.s32.totalorder %v228, %v274
          %v277 = vstv %s273
          %v278 = vsel %vm275, %v277, %v245
          %v279 = vsel %vm276, %v277, %v246
          %v280 = vstv %s272
          %vm281 = vcmp.eq.s32.totalorder %v244, %v280
          %v282 = vsel %vm281, 2147483647, %v244
        $region41: #{tpu_custom_call.1} parent=35 // loop_footer
          %s243 = sadd.s32 1, %s239
        $region42: #{tpu_custom_call.1} parent=35 // loop_footer_branch
          %238 = sbr.rel target = $region38
        $region43: #{tpu_custom_call.1} parent=35 // loop_exit
          _
        %vm283 = vcmask 7168
        %284 = vst.msk [vmem:[#allocation3] sm:$0xff] %vm283, %v245
        %285 = vst.msk [vmem:[#allocation3 + $0x8] sm:$0xff] %vm283, %v246
        %286 = vst [vmem:[#allocation2] sm:$0x1] %v225
      $region36: #{tpu_custom_call.1} parent=31 // pred_fallthru
        _
      %p287 = scmp.lt.s32.totalorder %s223, 16
      // Predicated region
      $region44: #{tpu_custom_call.1} parent=31 // pred_check
        %p288 = pneg %p287
      $region45: #{tpu_custom_call.1} parent=31 // pred_check_branch
        %290 = sbr.rel (%p288) target = $region47
      $region46: #{tpu_custom_call.1} parent=31 // pred_region
        %v291 = vadd.s32 %v227, 16
        %v292 = vadd.s32 %v227, 24
        %v293 = vadd.s32 %v227, 32
        %v294 = vadd.s32 %v227, 40
        %v295 = vadd.s32 %v227, 48
        %v296 = vadd.s32 %v227, 56
        %v297 = vadd.s32 %v227, 64
        %v298 = vadd.s32 %v227, 72
        %v299 = vadd.s32 %v227, 80
        %v300 = vadd.s32 %v227, 88
        %v301 = vadd.s32 %v227, 96
        %v302 = vadd.s32 %v227, 104
        %v303 = vadd.s32 %v227, 112
        %v304 = vadd.s32 %v227, 120
        %vm305 = vcmp.le.s32.totalorder %v227, %v225
        %vm306 = vcmp.le.s32.totalorder %v228, %v225
        %vm307 = vcmp.le.s32.totalorder %v291, %v225
        %vm308 = vcmp.le.s32.totalorder %v292, %v225
        %vm309 = vcmp.le.s32.totalorder %v293, %v225
        %vm310 = vcmp.le.s32.totalorder %v294, %v225
        %vm311 = vcmp.le.s32.totalorder %v295, %v225
        %vm312 = vcmp.le.s32.totalorder %v296, %v225
        %vm313 = vcmp.le.s32.totalorder %v297, %v225
        %vm314 = vcmp.le.s32.totalorder %v298, %v225
        %vm315 = vcmp.le.s32.totalorder %v299, %v225
        %vm316 = vcmp.le.s32.totalorder %v300, %v225
        %vm317 = vcmp.le.s32.totalorder %v301, %v225
        %vm318 = vcmp.le.s32.totalorder %v302, %v225
        %vm319 = vcmp.le.s32.totalorder %v303, %v225
        %vm320 = vcmp.le.s32.totalorder %v304, %v225
        %v321 = vsel %vm305, 1, 0
        %v322 = vsel %vm306, 1, 0
        %v323 = vsel %vm307, 1, 0
        %v324 = vsel %vm308, 1, 0
        %v325 = vsel %vm309, 1, 0
        %v326 = vsel %vm310, 1, 0
        %v327 = vsel %vm311, 1, 0
        %v328 = vsel %vm312, 1, 0
        %v329 = vsel %vm313, 1, 0
        %v330 = vsel %vm314, 1, 0
        %v331 = vsel %vm315, 1, 0
        %v332 = vsel %vm316, 1, 0
        %v333 = vsel %vm317, 1, 0
        %v334 = vsel %vm318, 1, 0
        %v335 = vsel %vm319, 1, 0
        %v336 = vsel %vm320, 1, 0
        %v337 = vcvt.s32.f32 %v321
        %v338 = vcvt.s32.f32 %v322
        %v339 = vcvt.s32.f32 %v323
        %v340 = vcvt.s32.f32 %v324
        %v341 = vcvt.s32.f32 %v325
        %v342 = vcvt.s32.f32 %v326
        %v343 = vcvt.s32.f32 %v327
        %v344 = vcvt.s32.f32 %v328
        %v345 = vcvt.s32.f32 %v329
        %v346 = vcvt.s32.f32 %v330
        %v347 = vcvt.s32.f32 %v331
        %v348 = vcvt.s32.f32 %v332
        %v349 = vcvt.s32.f32 %v333
        %v350 = vcvt.s32.f32 %v334
        %v351 = vcvt.s32.f32 %v335
        %v352 = vcvt.s32.f32 %v336
        %v353 = vld [vmem:[%s187] sm:$0x7]
        %v354 = vsel %vm201, %v353, 0.0
        %v355 = vrot.slane %v354, 4
        %v356 = vadd.f32 %v354, %v355
        %v357 = vrot.slane %v356, 2
        %v358 = vadd.f32 %v356, %v357
        %v359 = vrot.slane %v358, 1
        %v360 = vadd.f32 %v358, %v359
        %vm361 = vcmp.ne.f32.partialorder %v360, 0.0
        %v362 = vsel %vm361, 1, 0
        %v363 = vcvt.s32.f32 %v362
        %364 = vmatpush.msra.mxu0 %v352
        %365 = vmatpush.msra.mxu0 %v351
        %366 = vmatpush.msra.mxu0 %v350
        %367 = vmatpush.msra.mxu0 %v349
        %368 = vmatpush.msra.mxu0 %v348
        %369 = vmatpush.msra.mxu0 %v347
        %370 = vmatpush.msra.mxu0 %v346
        %371 = vmatpush.msra.mxu0 %v345
        %372 = vmatpush.msra.mxu0 %v344
        %373 = vmatpush.msra.mxu0 %v343
        %374 = vmatpush.msra.mxu0 %v342
        %375 = vmatpush.msra.mxu0 %v341
        %376 = vmatpush.msra.mxu0 %v340
        %377 = vmatpush.msra.mxu0 %v339
        %378 = vmatpush.msra.mxu0 %v338
        %379 = vmatpush.msra.mxu0 %v337
        %380 = vmatmul.f32.gmra.mxu0 %v363
        %v381 = vpop.f32.mrf.mxu0
        %v382 = vadd.f32 0.0, %v381
        %383 = vdwg.mxu0
        %v384 = vcvt.f32.s32.to.zero.pseudo %v382
        %v385 = vsel %vm361, %v384, 4294967295
        %386 = vst [vmem:[#allocation2] sm:$0x1] %v385
        %p387 = scmp.gt.s32.totalorder %s223, 1
        %s388 = scalar_select %p387, %s223, 1
        %v389 = vld [vmem:[%s195] sm:$0xff]
        %v390 = vld [vmem:[%s195 + $0x8] sm:$0xff]
        %s391 = scvt.s32.f32 %s223
        %v392 = vstv %s391
        %v393 = vmul.f32 %v389, %v392
        %v394 = vmul.f32 %v390, %v392
        %v395 = vfloor.f32 %v393
        %v396 = vfloor.f32 %v394
        %v397 = vcvt.f32.s32.to.zero.pseudo %v395
        %v398 = vcvt.f32.s32.to.zero.pseudo %v396
        %s399 = ssub.s32 %s388, 1
        %v400 = vstv %s399
        %vm401 = vcmp.lt.s32.totalorder %v397, %v400
        %v402 = vsel %vm401, %v397, %v400
        %vm403 = vcmp.lt.s32.totalorder %v398, %v400
        %v404 = vsel %vm403, %v398, %v400
        %v405 = vadd.s32 %v402, 1
        %v406 = vadd.s32 %v404, 1
        %vm407 = vcmask 7168
        %408 = vst.msk [vmem:[#allocation3] sm:$0xff] %vm407, %v405
        %409 = vst.msk [vmem:[#allocation3 + $0x8] sm:$0xff] %vm407, %v406
      $region47: #{tpu_custom_call.1} parent=31 // pred_fallthru
        _
      %v410 = vld [vmem:[#allocation3] sm:$0xff]
      %v411 = vld [vmem:[#allocation3 + $0x8] sm:$0xff]
      %v412 = vld [vmem:[%s187] sm:$0x7]
      %v413 = vld [vmem:[#allocation2] sm:$0x1]
      %v414 = vperm.slane %v413, 0
      %415 = vset.pattern.permute.xlu0 0
      %416 = vperm.xlu0 %415, %v410
      %v417 = vpop.permute.xlu0 %416
      %418 = vset.pattern.permute.xlu0 0
      %419 = vperm.xlu0 %418, %v411
      %v420 = vpop.permute.xlu0 %419
      %vm421 = vcmp.eq.s32.totalorder %v414, %v417
      %vm422 = vcmp.eq.s32.totalorder %v414, %v420
      %v423 = vsel %vm421, 1, 0
      %v424 = vsel %vm422, 1, 0
      %v425 = vcvt.s32.f32 %v423
      %v426 = vcvt.s32.f32 %v424
      %427 = vmatpush.xpose.msra.mxu0 0.0
      %428 = vmatpush.xpose.msra.mxu0 0.0
      %429 = vmatpush.xpose.msra.mxu0 0.0
      %430 = vmatpush.xpose.msra.mxu0 0.0
      %431 = vmatpush.xpose.msra.mxu0 0.0
      %432 = vmatpush.xpose.msra.mxu0 0.0
      %433 = vmatpush.xpose.msra.mxu0 0.0
      %434 = vmatpush.xpose.msra.mxu0 0.0
      %435 = vmatpush.xpose.msra.mxu0 0.0
      %436 = vmatpush.xpose.msra.mxu0 0.0
      %437 = vmatpush.xpose.msra.mxu0 0.0
      %438 = vmatpush.xpose.msra.mxu0 0.0
      %439 = vmatpush.xpose.msra.mxu0 0.0
      %440 = vmatpush.xpose.msra.mxu0 0.0
      %441 = vmatpush.xpose.msra.mxu0 %v426
      %442 = vmatpush.xpose.msra.mxu0 %v425
      %443 = vmatmul.f32.gmra.mxu0 %v412
      %v444 = vpop.f32.mrf.mxu0
      %v445 = vadd.f32 0.0, %v444
      %446 = vdwg.mxu0
      %vm447 = vcmask 124928
      %448 = vst.msk [vmem:[%s199] sm:$0x7] %vm447, %v445
      %p449 = scmp.lt.s32.totalorder %s14, 1
      %s450 = scalar_select %p449, %s14, 1
      %s451 = smul.addr %s450, 4
      %s452 = scalar_lea.vmem %s3, %s451
      // Predicated region
      $region48: #{tpu_custom_call.1} parent=31 // pred_check
        %p453 = pneg %p110
      $region49: #{tpu_custom_call.1} parent=31 // pred_check_branch
        %455 = sbr.rel (%p453) target = $region51
      $region50: #{tpu_custom_call.1} parent=31 // pred_region
        _
      $region51: #{tpu_custom_call.1} parent=31 // pred_fallthru
        _
    $region32: #{tpu_custom_call.1} parent=5 // pred_fallthru
      _
    %p456 = scmp.le.s32.totalorder 2, %s9
    // Predicated region
    $region52: #{tpu_custom_call.1} parent=5 // pred_check
      %p457 = pneg %p456
    $region53: #{tpu_custom_call.1} parent=5 // pred_check_branch
      %459 = sbr.rel (%p457) target = $region55
    $region54: #{tpu_custom_call.1} parent=5 // pred_region
      %s460 = ssub.s32 %s9, 2
      // Predicated region
      $region56: #{tpu_custom_call.1} parent=54 // pred_check
        %p461 = pneg %p116
      $region57: #{tpu_custom_call.1} parent=54 // pred_check_branch
        %463 = sbr.rel (%p461) target = $region59
      $region58: #{tpu_custom_call.1} parent=54 // pred_region
        %p464 = scmp.lt.s32.totalorder %s15, 1
        %s465 = scalar_select %p464, %s15, 1
        %s466 = smul.addr %s465, 4
        %s467 = scalar_lea.vmem %s3, %s466
      $region59: #{tpu_custom_call.1} parent=54 // pred_fallthru
        _
    $region55: #{tpu_custom_call.1} parent=5 // pred_fallthru
      _
  $region6: #{tpu_custom_call.1} parent=0 // loop_footer
    %s13 = sadd.s32 1, %s9
  $region7: #{tpu_custom_call.1} parent=0 // loop_footer_branch
    %8 = sbr.rel target = $region3
  $region8: #{tpu_custom_call.1} parent=0 // loop_exit
    _

</llo_original>
